<compile_context>
chip_gen: v7x
topology: tpu7x:2x2x1
jax: 0.10.0
libtpu: 0.0.40
codegen_flags: <defaults>
</compile_context>

<pallas_src>
import functools

import jax
import jax.numpy as jnp
from jax.experimental import pallas as pl
from jax.experimental.pallas import tpu as pltpu


def _round_up(a: int, b: int) -> int:
    return ((a + b - 1) // b) * b


def _block_diag(w, g):
    """Block-diagonal stack of `g` copies of w: (din, dout) -> (g*din, g*dout)."""
    din, dout = w.shape
    eye = jnp.eye(g, dtype=w.dtype)
    return (eye[:, None, :, None] * w[None, :, None, :]).reshape(g * din, g * dout)


def _mlp_kernel(x_ref, w1_ref, b1_ref, w2_ref, b2_ref, o_ref):
    # x_ref : (tm_s, G*ch)       f32   (G logical rows packed per slab row)
    # w1_ref: (G*ch, G*hidden)   bf16  block-diagonal fc1 weight
    # b1_ref: (1, G*hidden)      f32
    # w2_ref: (G*hidden, G*out)  bf16  block-diagonal fc2 weight
    # b2_ref: (1, G*out)         f32
    # o_ref : (tm_s, G*out)      f32
    x = x_ref[...].astype(jnp.bfloat16)
    h = jnp.dot(x, w1_ref[...], preferred_element_type=jnp.float32) + b1_ref[...]
    h = jnp.maximum(h, 0.0)                                   # ReLU (f32)
    y = jnp.dot(h.astype(jnp.bfloat16), w2_ref[...],
                preferred_element_type=jnp.float32) + b2_ref[...]
    o_ref[...] = jax.nn.sigmoid(y).astype(o_ref.dtype)        # sigmoid (f32)


@functools.partial(jax.jit, static_argnames=("target_rows",))
def binary_classifier_forward(x, w1, b1, w2, b2, *, target_rows=4096):
    """x: (t, b, n, ch) f32.  Returns (b, t, n, dis_output_dim), matching
    sigmoid(relu(permute(x) @ w1 + b1) @ w2 + b2) of the PyTorch module."""
    t, b, n, ch = x.shape
    hidden = w1.shape[1]
    out_dim = w2.shape[1]
    M = t * b * n                        # logical rows, row-major over (t, b, n)

    # --- row-packing group: G consecutive rows share one 128-lane slab row ----
    G = 1
    for cand in (8, 4, 2):
        if M % cand == 0:
            G = cand
            break
    Ms = M // G                          # slab rows

    # --- slab-row tile size (multiple of 16 sublanes, capped at array size) ---
    tm_s = _round_up(max(1, target_rows // G), 16)            # ~target_rows rows/step
    tm_s = min(tm_s, max(16, _round_up(pl.cdiv(Ms, 8), 16)))  # keep >= ~8 grid steps
    tm_s = min(tm_s, Ms)                                      # never exceed the array
    grid = (pl.cdiv(Ms, tm_s),)

    # --- operands --------------------------------------------------------------
    x_slab = x.reshape(Ms, G * ch)                            # free row-major reshape
    w1_blk = _block_diag(w1, G).astype(jnp.bfloat16)          # (G*ch, G*hidden)
    w2_blk = _block_diag(w2, G).astype(jnp.bfloat16)          # (G*hidden, G*out)
    b1_blk = jnp.tile(b1, G).reshape(1, G * hidden).astype(jnp.float32)
    b2_blk = jnp.tile(b2, G).reshape(1, G * out_dim).astype(jnp.float32)

    cost = pl.CostEstimate(
        flops=2 * M * G * (ch * hidden + hidden * out_dim),
        transcendentals=M * out_dim,
        bytes_accessed=(M * ch * x.dtype.itemsize             # x read
                        + M * out_dim * 4                     # packed output write
                        + (w1_blk.size + w2_blk.size) * 2
                        + (b1_blk.size + b2_blk.size) * 4),
    )

    out_slab = pl.pallas_call(
        _mlp_kernel,
        out_shape=jax.ShapeDtypeStruct((Ms, G * out_dim), jnp.float32),
        grid=grid,
        in_specs=[
            pl.BlockSpec((tm_s, G * ch), lambda i: (i, 0)),            # x slab tile
            pl.BlockSpec((G * ch, G * hidden), lambda i: (0, 0)),      # fc1 weight
            pl.BlockSpec((1, G * hidden), lambda i: (0, 0)),           # fc1 bias
            pl.BlockSpec((G * hidden, G * out_dim), lambda i: (0, 0)),  # fc2 weight
            pl.BlockSpec((1, G * out_dim), lambda i: (0, 0)),          # fc2 bias
        ],
        out_specs=pl.BlockSpec((tm_s, G * out_dim), lambda i: (i, 0)),
        compiler_params=pltpu.CompilerParams(
            dimension_semantics=("parallel",)),   # v7x: shard row axis over both TCs
        cost_estimate=cost,
    )(x_slab, w1_blk, b1_blk, w2_blk, b2_blk)

    # Unpack the slabs and apply the (t, b) permute on the small output; XLA
    # fuses the reshape + transpose into a single pass over M*out_dim elements
    # (4x less data than transposing x would have been).
    out = out_slab.reshape(t, b, n, out_dim)
    return jnp.transpose(out, (1, 0, 2, 3))


def init_params(key, input_dim, dis_output_dim, hidden=32):
    """Deterministic synthetic params matching nn.Linear init (stored (in, out))."""
    k1, k2, k3, k4 = jax.random.split(key, 4)
    bound1 = 1.0 / (input_dim ** 0.5)
    bound2 = 1.0 / (hidden ** 0.5)
    w1 = jax.random.uniform(k1, (input_dim, hidden), jnp.float32, -bound1, bound1)
    b1 = jax.random.uniform(k2, (hidden,), jnp.float32, -bound1, bound1)
    w2 = jax.random.uniform(k3, (hidden, dis_output_dim), jnp.float32, -bound2, bound2)
    b2 = jax.random.uniform(k4, (dis_output_dim,), jnp.float32, -bound2, bound2)
    return w1, b1, w2, b2


if __name__ == "__main__":
    key = jax.random.PRNGKey(0)
    kx, kp = jax.random.split(key)

    # x: (t, b, n, ch) as in the PyTorch forward.
    t, b, n, ch = 8, 2, 16, 16
    dis_output_dim = 4

    x = jax.random.normal(kx, (t, b, n, ch), dtype=jnp.float32)
    w1, b1, w2, b2 = init_params(kp, ch, dis_output_dim)

    y = binary_classifier_forward(x, w1, b1, w2, b2)
    y = jax.block_until_ready(y)
    assert y.shape == (b, t, n, dis_output_dim)

    # Reference 1: mirror of the kernel's precision policy (bf16 operands on
    # the MXU, f32 accumulation / bias / activations) -> tight tolerance.
    f32 = jnp.float32
    xb = x.astype(jnp.bfloat16).astype(f32)
    w1b = w1.astype(jnp.bfloat16).astype(f32)
    w2b = w2.astype(jnp.bfloat16).astype(f32)
    xp = jnp.transpose(xb, (1, 0, 2, 3))
    h = jnp.maximum(xp @ w1b + b1, 0.0)
    ref = jax.nn.sigmoid(h.astype(jnp.bfloat16).astype(f32) @ w2b + b2)
    assert jnp.allclose(y, ref, atol=5e-3), float(jnp.max(jnp.abs(y - ref)))

    # Reference 2: pure-f32 math (the PyTorch module's exact semantics).
    xp32 = jnp.transpose(x, (1, 0, 2, 3))
    ref32 = jax.nn.sigmoid(jnp.maximum(xp32 @ w1 + b1, 0.0) @ w2 + b2)
    assert jnp.allclose(y, ref32, atol=3e-2), float(jnp.max(jnp.abs(y - ref32)))

    print("KERNEL_OK")
</pallas_src>

<mosaic_0001>
module attributes {stable_mosaic.version = 11 : i64} {
  func.func @_mlp_kernel(%arg0: i32, %arg1: memref<16x128xf32, #tpu.memory_space<vmem>>, %arg2: memref<128x256xbf16, #tpu.memory_space<vmem>>, %arg3: memref<1x256xf32, #tpu.memory_space<vmem>>, %arg4: memref<256x32xbf16, #tpu.memory_space<vmem>>, %arg5: memref<1x32xf32, #tpu.memory_space<vmem>>, %arg6: memref<16x32xf32, #tpu.memory_space<vmem>>) attributes {dimension_semantics = [#tpu.dimension_semantics<parallel>], iteration_bounds = array<i64: 2>, scalar_prefetch = 0 : i64, scratch_operands = 0 : i64, tpu.core_type = #tpu.core_type<tc>, window_params = [{transform_indices = @transform_0, window_bounds = array<i64: 16, 128>}, {pipeline_mode = #tpu.pipeline_mode<synchronous>, transform_indices = @transform_1, window_bounds = array<i64: 128, 256>}, {pipeline_mode = #tpu.pipeline_mode<synchronous>, transform_indices = @transform_2, window_bounds = array<i64: 1, 256>}, {pipeline_mode = #tpu.pipeline_mode<synchronous>, transform_indices = @transform_3, window_bounds = array<i64: 256, 32>}, {pipeline_mode = #tpu.pipeline_mode<synchronous>, transform_indices = @transform_4, window_bounds = array<i64: 1, 32>}, {transform_indices = @transform_5, window_bounds = array<i64: 16, 32>}]} {
    %c0 = arith.constant 0 : index
    %c0_0 = arith.constant 0 : index
    %0 = vector.load %arg1[%c0, %c0_0] : memref<16x128xf32, #tpu.memory_space<vmem>>, vector<16x128xf32>
    %1 = arith.truncf %0 : vector<16x128xf32> to vector<16x128xbf16>
    %c0_1 = arith.constant 0 : index
    %c0_2 = arith.constant 0 : index
    %2 = vector.load %arg2[%c0_1, %c0_2] : memref<128x256xbf16, #tpu.memory_space<vmem>>, vector<128x256xbf16>
    %cst = arith.constant dense<0.000000e+00> : vector<16x256xf32>
    %3 = tpu.matmul %1, %2, %cst {dimension_numbers = #tpu.dot_dimension_numbers<[1], [0], [0], [1], [0, 0, 1, 1], [], []>} : vector<16x128xbf16>, vector<128x256xbf16>, vector<16x256xf32> -> vector<16x256xf32>
    %c0_3 = arith.constant 0 : index
    %c0_4 = arith.constant 0 : index
    %4 = vector.load %arg3[%c0_3, %c0_4] : memref<1x256xf32, #tpu.memory_space<vmem>>, vector<1x256xf32>
    %5 = vector.broadcast %4 : vector<1x256xf32> to vector<16x256xf32>
    %6 = arith.addf %3, %5 : vector<16x256xf32>
    %cst_5 = arith.constant 0.000000e+00 : f32
    %7 = vector.broadcast %cst_5 : f32 to vector<16x256xf32>
    %8 = arith.maximumf %6, %7 : vector<16x256xf32>
    %9 = arith.truncf %8 : vector<16x256xf32> to vector<16x256xbf16>
    %c0_6 = arith.constant 0 : index
    %c0_7 = arith.constant 0 : index
    %10 = vector.load %arg4[%c0_6, %c0_7] : memref<256x32xbf16, #tpu.memory_space<vmem>>, vector<256x32xbf16>
    %cst_8 = arith.constant dense<0.000000e+00> : vector<16x32xf32>
    %11 = tpu.matmul %9, %10, %cst_8 {dimension_numbers = #tpu.dot_dimension_numbers<[1], [0], [0], [1], [0, 0, 1, 1], [], []>} : vector<16x256xbf16>, vector<256x32xbf16>, vector<16x32xf32> -> vector<16x32xf32>
    %c0_9 = arith.constant 0 : index
    %c0_10 = arith.constant 0 : index
    %12 = vector.load %arg5[%c0_9, %c0_10] : memref<1x32xf32, #tpu.memory_space<vmem>>, vector<1x32xf32>
    %13 = vector.broadcast %12 : vector<1x32xf32> to vector<16x32xf32>
    %14 = arith.addf %11, %13 : vector<16x32xf32>
    %15 = arith.negf %14 : vector<16x32xf32>
    %16 = math.exp %15 : vector<16x32xf32>
    %cst_11 = arith.constant 1.000000e+00 : f32
    %17 = vector.broadcast %cst_11 : f32 to vector<16x32xf32>
    %18 = arith.addf %17, %16 : vector<16x32xf32>
    %19 = arith.divf %17, %18 : vector<16x32xf32>
    %c0_12 = arith.constant 0 : index
    %c0_13 = arith.constant 0 : index
    %20 = vector.load %arg6[%c0_12, %c0_13] : memref<16x32xf32, #tpu.memory_space<vmem>>, vector<16x32xf32>
    tpu.vector_store %arg6[%c0_12, %c0_13], %19 {strides = array<i32>} : memref<16x32xf32, #tpu.memory_space<vmem>>, vector<16x32xf32>,
    return
  }
  func.func @transform_0(%arg0: i32) -> (i32, i32) {
    %c0_i32 = arith.constant 0 : i32
    %c0_i32_0 = arith.constant 0 : i32
    return %arg0, %c0_i32 : i32, i32
  }
  func.func @transform_1(%arg0: i32) -> (i32, i32) {
    %c0_i32 = arith.constant 0 : i32
    %c0_i32_0 = arith.constant 0 : i32
    %c0_i32_1 = arith.constant 0 : i32
    return %c0_i32, %c0_i32_0 : i32, i32
  }
  func.func @transform_2(%arg0: i32) -> (i32, i32) {
    %c0_i32 = arith.constant 0 : i32
    %c0_i32_0 = arith.constant 0 : i32
    %c0_i32_1 = arith.constant 0 : i32
    return %c0_i32, %c0_i32_0 : i32, i32
  }
  func.func @transform_3(%arg0: i32) -> (i32, i32) {
    %c0_i32 = arith.constant 0 : i32
    %c0_i32_0 = arith.constant 0 : i32
    %c0_i32_1 = arith.constant 0 : i32
    return %c0_i32, %c0_i32_0 : i32, i32
  }
  func.func @transform_4(%arg0: i32) -> (i32, i32) {
    %c0_i32 = arith.constant 0 : i32
    %c0_i32_0 = arith.constant 0 : i32
    %c0_i32_1 = arith.constant 0 : i32
    return %c0_i32, %c0_i32_0 : i32, i32
  }
  func.func @transform_5(%arg0: i32) -> (i32, i32) {
    %c0_i32 = arith.constant 0 : i32
    %c0_i32_0 = arith.constant 0 : i32
    return %arg0, %c0_i32 : i32, i32
  }
}

</mosaic_0001>

<llo_original>
// kernel: tile.13
$region0: #{tile.13}
  #allocation0 [shape = 's32[1]{0}', space=sflag, size = 0x4, scoped, tag = 'scoped memory for tile.13']
  %s0 = inlined_call_operand.vmem [shape: f32[32], index: 0, kind: input, shape index: {}]
  %s1 = inlined_call_operand.vmem [shape: f32[8,32], index: 1, kind: output, shape index: {}]
  // Predicated region
  $region2: #{tile.13} parent=0 // pred_check
    _
  $region3: #{tile.13} parent=0 // pred_check_branch
    %3 = sbr.rel (0) target = $region5
  $region4: #{tile.13} parent=0 // pred_region
    _
  $region5: #{tile.13} parent=0 // pred_fallthru
    _
  %v4 = vld [vmem:[%s0] ss:$0 sm:$0xff]
  %5 = vst [vmem:[%s1] sm:$0xff] %v4

// kernel: tile.14
$region0: #{tile.14}
  %s0 = inlined_call_operand.vmem [shape: f32[8,32], index: 0, kind: input, shape index: {}]
  %s1 = inlined_call_operand.vmem [shape: f32[1,256], index: 1, kind: output, shape index: {}]
  $region1: #{tile.14} parent=0
    #allocation0 [shape = 'u8[8192]{0}', space=vmem, size = 0x2000, scoped, tag = 'scoped mem for output reshape']
    %s2 = smov 3
    %v3 = vld [vmem:[%s0] ss:$4 sm:%s2]
    %vm4 = vcmask 261120
    %5 = vst.msk [vmem:[#allocation0] ss:$8 sm:$0x3] %vm4, %v3
    %s6 = scalar_lea.vmem %s0, 3
    %s7 = smov 3
    %v8 = vld [vmem:[%s6] ss:$4 sm:%s7]
    %9 = vrot.lane.b32.xlu0 %v8, 96
    %v10 = vpop.permute.xlu0 %9
    %vm11 = vcmask 1048320
    %12 = vst.msk [vmem:[#allocation0] ss:$8 sm:$0x3] %vm11, %v10
    %s13 = scalar_lea.vmem %s0, 2
    %s14 = smov 3
    %v15 = vld [vmem:[%s13] ss:$4 sm:%s14]
    %16 = vrot.lane.b32.xlu0 %v15, 64
    %v17 = vpop.permute.xlu0 %16
    %vm18 = vcmask 785920
    %19 = vst.msk [vmem:[#allocation0] ss:$8 sm:$0x3] %vm18, %v17
    %s20 = scalar_lea.vmem %s0, 1
    %s21 = smov 3
    %v22 = vld [vmem:[%s20] ss:$4 sm:%s21]
    %23 = vrot.lane.b32.xlu0 %v22, 32
    %v24 = vpop.permute.xlu0 %23
    %vm25 = vcmask 523520
    %26 = vst.msk [vmem:[#allocation0] ss:$8 sm:$0x3] %vm25, %v24
    %s28 = sshllo.u32 0, 1
    %v30 = vld [vmem:[#allocation0] sm:%s28]
    %s31 = sshllo.u32 0, 1
    %32 = vst [vmem:[%s1] sm:%s31] %v30
    %s33 = scalar_lea.vmem [#allocation0], 8
    %v34 = vld [vmem:[%s33] sm:%s28]
    %s35 = sshllo.u32 0, 1
    %s36 = scalar_lea.vmem %s1, 1
    %37 = vst [vmem:[%s36] sm:%s35] %v34

// kernel: tile.18
$region0: #{tile.18}
  #allocation0 [shape = 's32[1]{0}', space=sflag, size = 0x4, scoped, tag = 'scoped memory for tile.18']
  %s0 = inlined_call_operand.vmem [shape: f32[4], index: 0, kind: input, shape index: {}]
  %s1 = inlined_call_operand.vmem [shape: f32[8,4], index: 1, kind: output, shape index: {}]
  // Predicated region
  $region2: #{tile.18} parent=0 // pred_check
    _
  $region3: #{tile.18} parent=0 // pred_check_branch
    %3 = sbr.rel (0) target = $region5
  $region4: #{tile.18} parent=0 // pred_region
    _
  $region5: #{tile.18} parent=0 // pred_fallthru
    _
  %v4 = vld [vmem:[%s0] ss:$0 sm:$0xff]
  %5 = vst [vmem:[%s1] sm:$0xff] %v4

// kernel: tile.19
$region0: #{tile.19}
  %s0 = inlined_call_operand.vmem [shape: f32[8,4], index: 0, kind: input, shape index: {}]
  %s1 = inlined_call_operand.vmem [shape: f32[1,32], index: 1, kind: output, shape index: {}]
  $region1: #{tile.19} parent=0
    #allocation0 [shape = 'u8[4096]{0}', space=vmem, size = 0x1000, scoped, tag = 'scoped mem for output reshape']
    %v2 = vld [vmem:[%s0] sm:$0x1]
    %vm3 = vcmask 31744
    %4 = vst.msk [vmem:[#allocation0] sm:$0x1] %vm3, %v2
    %s5 = scalar_lea.vmem %s0, 7
    %v6 = vld [vmem:[%s5] sm:$0x1]
    %7 = vrot.lane.b32.xlu0 %v6, 28
    %v8 = vpop.permute.xlu0 %7
    %vm9 = vcmask 261344
    %10 = vst.msk [vmem:[#allocation0] sm:$0x1] %vm9, %v8
    %s11 = scalar_lea.vmem %s0, 6
    %v12 = vld [vmem:[%s11] sm:$0x1]
    %13 = vrot.lane.b32.xlu0 %v12, 24
    %v14 = vpop.permute.xlu0 %13
    %vm15 = vcmask 228544
    %16 = vst.msk [vmem:[#allocation0] sm:$0x1] %vm15, %v14
    %s17 = scalar_lea.vmem %s0, 5
    %v18 = vld [vmem:[%s17] sm:$0x1]
    %19 = vrot.lane.b32.xlu0 %v18, 20
    %v20 = vpop.permute.xlu0 %19
    %vm21 = vcmask 195744
    %22 = vst.msk [vmem:[#allocation0] sm:$0x1] %vm21, %v20
    %s23 = scalar_lea.vmem %s0, 4
    %v24 = vld [vmem:[%s23] sm:$0x1]
    %25 = vrot.lane.b32.xlu0 %v24, 16
    %v26 = vpop.permute.xlu0 %25
    %vm27 = vcmask 162944
    %28 = vst.msk [vmem:[#allocation0] sm:$0x1] %vm27, %v26
    %s29 = scalar_lea.vmem %s0, 3
    %v30 = vld [vmem:[%s29] sm:$0x1]
    %31 = vrot.lane.b32.xlu0 %v30, 12
    %v32 = vpop.permute.xlu0 %31
    %vm33 = vcmask 130144
    %34 = vst.msk [vmem:[#allocation0] sm:$0x1] %vm33, %v32
    %s35 = scalar_lea.vmem %s0, 2
    %v36 = vld [vmem:[%s35] sm:$0x1]
    %37 = vrot.lane.b32.xlu0 %v36, 8
    %v38 = vpop.permute.xlu0 %37
    %vm39 = vcmask 97344
    %40 = vst.msk [vmem:[#allocation0] sm:$0x1] %vm39, %v38
    %s41 = scalar_lea.vmem %s0, 1
    %v42 = vld [vmem:[%s41] sm:$0x1]
    %43 = vrot.lane.b32.xlu0 %v42, 4
    %v44 = vpop.permute.xlu0 %43
    %vm45 = vcmask 64544
    %46 = vst.msk [vmem:[#allocation0] sm:$0x1] %vm45, %v44
    %s48 = sshllo.u32 0, 1
    %v50 = vld [vmem:[#allocation0] sm:%s48]
    %s51 = sshllo.u32 0, 1
    %52 = vst [vmem:[%s1] sm:%s51] %v50

// kernel: binary_classifier_forward.1
$region0: #{binary_classifier_forward.1}
  #allocation0 [shape = 'u32[]', space=smem, size = 0x4, offset = 0x4, fixed_abs, tag = 'smem constant byte address 0x4 - core index']
  #allocation1 [shape = 'u32[144,128]{1,0:T(1,128)}', space=vmem, size = 0x12000, scoped, tag = 'internal scratch']
  %s0 = inlined_call_operand.vmem [shape: f32[32,128], index: 0, kind: input, shape index: {}]
  %s1 = inlined_call_operand.vmem [shape: bf16[128,256], index: 1, kind: input, shape index: {}]
  %s2 = inlined_call_operand.vmem [shape: f32[1,256], index: 2, kind: input, shape index: {}]
  %s3 = inlined_call_operand.vmem [shape: bf16[256,32], index: 3, kind: input, shape index: {}]
  %s4 = inlined_call_operand.vmem [shape: f32[1,32], index: 4, kind: input, shape index: {}]
  %s5 = inlined_call_operand.vmem [shape: f32[32,32], index: 5, kind: output, shape index: {}]
  %s6 = sld [smem:[#allocation0]]
  $region53: #{binary_classifier_forward.1} parent=0
    _
  %s8 = ssub.s32 1, %s6
  %s9 = scalar_select 0, %s8, %s6
  loop: start=0, step=1, limit=4
  $region2: #{binary_classifier_forward.1} parent=0 // loop_pre_header
    _
  $region3: #{binary_classifier_forward.1} parent=0 // loop_header
    %s11 = sphi 0, %s15
    %p12 = scmp.ge.s32.totalorder %s11, 4
    %s21 = sphi 0, %s23
    %s24 = sphi 0, %s21
    %s25 = sphi 0, %s24
    %s41 = sphi 0, %s25
    %s45 = sphi 0, %s45
    %s47 = sphi 0, %s45
    %s48 = sphi 0, %s47
    %s62 = sphi 0, %s48
    %s66 = sphi 0, %s66
    %s68 = sphi 0, %s66
    %s69 = sphi 0, %s68
    %s83 = sphi 0, %s69
    %s87 = sphi 0, %s87
    %s89 = sphi 0, %s87
    %s90 = sphi 0, %s89
    %s104 = sphi 0, %s90
    %s108 = sphi 0, %s108
    %s110 = sphi 0, %s108
    %s111 = sphi 0, %s110
    %s125 = sphi 0, %s111
    %s131 = sphi 0, %s133
    %s134 = sphi 0, %s131
    %s135 = sphi 0, %s134
    %s151 = sphi 0, %s135
  $region4: #{binary_classifier_forward.1} parent=0 // loop_header_branch
    %14 = sbr.rel (%p12) target = $region8
  $region5: #{binary_classifier_forward.1} parent=0 // loop_body
    %s16 = ssub.s32 %s11, 1
    %s17 = ssub.s32 %s11, 2
    %s18 = sadd.s32 %s11, 1
    %s19 = ssub.s32 %s11, %s18
    %p20 = scmp.eq.s32.totalorder %s19, 0
    %s22 = sadd.s32 %s21, 1
    %s23 = scalar_select %p20, %s21, %s22
    %p26 = pneg %p20
    %p27 = scmp.eq.s32.totalorder %s11, 1
    %p28 = por %p26, %p27
    %p29 = scmp.ne.s32.totalorder %s21, %s24
    %p30 = scmp.eq.s32.totalorder %s11, 0
    %p31 = por %p29, %p30
    %p32 = scmp.ne.s32.totalorder %s21, %s24
    %p33 = scmp.eq.s32.totalorder %s16, 1
    %p34 = por %p32, %p33
    %p35 = scmp.ne.s32.totalorder %s24, %s25
    %p36 = scmp.eq.s32.totalorder %s16, 0
    %p37 = por %p35, %p36
    %p38 = scmp.ne.s32.totalorder %s24, %s25
    %p39 = scmp.eq.s32.totalorder %s17, 1
    %p40 = por %p38, %p39
    %p42 = scmp.ne.s32.totalorder %s25, %s41
    %p43 = scmp.eq.s32.totalorder %s17, 0
    %p44 = por %p42, %p43
    %s46 = sadd.s32 %s45, 1
    %p49 = scmp.eq.s32.totalorder %s11, 1
    %p50 = scmp.ne.s32.totalorder %s45, %s47
    %p51 = scmp.eq.s32.totalorder %s11, 0
    %p52 = por %p50, %p51
    %p53 = scmp.ne.s32.totalorder %s45, %s47
    %p54 = scmp.eq.s32.totalorder %s16, 1
    %p55 = por %p53, %p54
    %p56 = scmp.ne.s32.totalorder %s47, %s48
    %p57 = scmp.eq.s32.totalorder %s16, 0
    %p58 = por %p56, %p57
    %p59 = scmp.ne.s32.totalorder %s47, %s48
    %p60 = scmp.eq.s32.totalorder %s17, 1
    %p61 = por %p59, %p60
    %p63 = scmp.ne.s32.totalorder %s48, %s62
    %p64 = scmp.eq.s32.totalorder %s17, 0
    %p65 = por %p63, %p64
    %s67 = sadd.s32 %s66, 1
    %p70 = scmp.eq.s32.totalorder %s11, 1
    %p71 = scmp.ne.s32.totalorder %s66, %s68
    %p72 = scmp.eq.s32.totalorder %s11, 0
    %p73 = por %p71, %p72
    %p74 = scmp.ne.s32.totalorder %s66, %s68
    %p75 = scmp.eq.s32.totalorder %s16, 1
    %p76 = por %p74, %p75
    %p77 = scmp.ne.s32.totalorder %s68, %s69
    %p78 = scmp.eq.s32.totalorder %s16, 0
    %p79 = por %p77, %p78
    %p80 = scmp.ne.s32.totalorder %s68, %s69
    %p81 = scmp.eq.s32.totalorder %s17, 1
    %p82 = por %p80, %p81
    %p84 = scmp.ne.s32.totalorder %s69, %s83
    %p85 = scmp.eq.s32.totalorder %s17, 0
    %p86 = por %p84, %p85
    %s88 = sadd.s32 %s87, 1
    %p91 = scmp.eq.s32.totalorder %s11, 1
    %p92 = scmp.ne.s32.totalorder %s87, %s89
    %p93 = scmp.eq.s32.totalorder %s11, 0
    %p94 = por %p92, %p93
    %p95 = scmp.ne.s32.totalorder %s87, %s89
    %p96 = scmp.eq.s32.totalorder %s16, 1
    %p97 = por %p95, %p96
    %p98 = scmp.ne.s32.totalorder %s89, %s90
    %p99 = scmp.eq.s32.totalorder %s16, 0
    %p100 = por %p98, %p99
    %p101 = scmp.ne.s32.totalorder %s89, %s90
    %p102 = scmp.eq.s32.totalorder %s17, 1
    %p103 = por %p101, %p102
    %p105 = scmp.ne.s32.totalorder %s90, %s104
    %p106 = scmp.eq.s32.totalorder %s17, 0
    %p107 = por %p105, %p106
    %s109 = sadd.s32 %s108, 1
    %p112 = scmp.eq.s32.totalorder %s11, 1
    %p113 = scmp.ne.s32.totalorder %s108, %s110
    %p114 = scmp.eq.s32.totalorder %s11, 0
    %p115 = por %p113, %p114
    %p116 = scmp.ne.s32.totalorder %s108, %s110
    %p117 = scmp.eq.s32.totalorder %s16, 1
    %p118 = por %p116, %p117
    %p119 = scmp.ne.s32.totalorder %s110, %s111
    %p120 = scmp.eq.s32.totalorder %s16, 0
    %p121 = por %p119, %p120
    %p122 = scmp.ne.s32.totalorder %s110, %s111
    %p123 = scmp.eq.s32.totalorder %s17, 1
    %p124 = por %p122, %p123
    %p126 = scmp.ne.s32.totalorder %s111, %s125
    %p127 = scmp.eq.s32.totalorder %s17, 0
    %p128 = por %p126, %p127
    %s129 = ssub.s32 %s11, %s18
    %p130 = scmp.eq.s32.totalorder %s129, 0
    %s132 = sadd.s32 %s131, 1
    %s133 = scalar_select %p130, %s131, %s132
    %p136 = pneg %p130
    %p137 = scmp.eq.s32.totalorder %s11, 1
    %p138 = por %p136, %p137
    %p139 = scmp.ne.s32.totalorder %s131, %s134
    %p140 = scmp.eq.s32.totalorder %s11, 0
    %p141 = por %p139, %p140
    %p142 = scmp.ne.s32.totalorder %s131, %s134
    %p143 = scmp.eq.s32.totalorder %s16, 1
    %p144 = por %p142, %p143
    %p145 = scmp.ne.s32.totalorder %s134, %s135
    %p146 = scmp.eq.s32.totalorder %s16, 0
    %p147 = por %p145, %p146
    %p148 = scmp.ne.s32.totalorder %s134, %s135
    %p149 = scmp.eq.s32.totalorder %s17, 1
    %p150 = por %p148, %p149
    %p152 = scmp.ne.s32.totalorder %s135, %s151
    %p153 = scmp.eq.s32.totalorder %s17, 0
    %p154 = por %p152, %p153
    %p155 = scmp.le.s32.totalorder 1, %s11
    %p156 = scmp.lt.s32.totalorder %s11, 3
    %p157 = pnand %p155, %p156
    %p158 = pneg %p157
    // Predicated region
    $region9: #{binary_classifier_forward.1} parent=5 // pred_check
      _
    $region10: #{binary_classifier_forward.1} parent=5 // pred_check_branch
      %160 = sbr.rel (%p157) target = $region12
    $region11: #{binary_classifier_forward.1} parent=5 // pred_region
      %s161 = ssub.s32 %s11, 1
      // Predicated region
      $region13: #{binary_classifier_forward.1} parent=11 // pred_check
        %p162 = pneg %p58
      $region14: #{binary_classifier_forward.1} parent=11 // pred_check_branch
        %164 = sbr.rel (%p162) target = $region16
      $region15: #{binary_classifier_forward.1} parent=11 // pred_region
        _
      $region16: #{binary_classifier_forward.1} parent=11 // pred_fallthru
        _
      // Predicated region
      $region17: #{binary_classifier_forward.1} parent=11 // pred_check
        %p165 = pneg %p79
      $region18: #{binary_classifier_forward.1} parent=11 // pred_check_branch
        %167 = sbr.rel (%p165) target = $region20
      $region19: #{binary_classifier_forward.1} parent=11 // pred_region
        _
      $region20: #{binary_classifier_forward.1} parent=11 // pred_fallthru
        _
      // Predicated region
      $region21: #{binary_classifier_forward.1} parent=11 // pred_check
        %p168 = pneg %p100
      $region22: #{binary_classifier_forward.1} parent=11 // pred_check_branch
        %170 = sbr.rel (%p168) target = $region24
      $region23: #{binary_classifier_forward.1} parent=11 // pred_region
        _
      $region24: #{binary_classifier_forward.1} parent=11 // pred_fallthru
        _
      // Predicated region
      $region25: #{binary_classifier_forward.1} parent=11 // pred_check
        %p171 = pneg %p121
      $region26: #{binary_classifier_forward.1} parent=11 // pred_check_branch
        %173 = sbr.rel (%p171) target = $region28
      $region27: #{binary_classifier_forward.1} parent=11 // pred_region
        _
      $region28: #{binary_classifier_forward.1} parent=11 // pred_fallthru
        _
    $region12: #{binary_classifier_forward.1} parent=5 // pred_fallthru
      _
    %p174 = scmp.lt.s32.totalorder %s11, 2
    // Predicated region
    $region29: #{binary_classifier_forward.1} parent=5 // pred_check
      %p175 = pneg %p174
    $region30: #{binary_classifier_forward.1} parent=5 // pred_check_branch
      %177 = sbr.rel (%p175) target = $region32
    $region31: #{binary_classifier_forward.1} parent=5 // pred_region
      // Predicated region
      $region33: #{binary_classifier_forward.1} parent=31 // pred_check
        %p178 = pneg %p31
      $region34: #{binary_classifier_forward.1} parent=31 // pred_check_branch
        %180 = sbr.rel (%p178) target = $region36
      $region35: #{binary_classifier_forward.1} parent=31 // pred_region
        %s181 = smul.u32 2, %s11
        %p182 = scmp.lt.s32.totalorder %s181, 3
        %s183 = scalar_select %p182, %s181, 3
        %s184 = smul.addr %s183, 8
        %s185 = scalar_lea.vmem %s0, %s184
        %s186 = smul.u32 2, %s11
      $region36: #{binary_classifier_forward.1} parent=31 // pred_fallthru
        _
    $region32: #{binary_classifier_forward.1} parent=5 // pred_fallthru
      _
    %p187 = scmp.le.s32.totalorder 1, %s11
    %p188 = scmp.lt.s32.totalorder %s11, 3
    %p189 = pnand %p187, %p188
    %p190 = pneg %p189
    // Predicated region
    $region37: #{binary_classifier_forward.1} parent=5 // pred_check
      _
    $region38: #{binary_classifier_forward.1} parent=5 // pred_check_branch
      %192 = sbr.rel (%p189) target = $region40
    $region39: #{binary_classifier_forward.1} parent=5 // pred_region
      %s193 = ssub.s32 %s11, 1
      %s194 = smul.u32 2, %s16
      %p195 = scmp.lt.s32.totalorder %s194, 3
      %s196 = scalar_select %p195, %s194, 3
      %s197 = smul.addr %s196, 8
      %s198 = scalar_lea.vmem %s0, %s197
      %p199 = pneg %p37
      %p200 = pneg %p34
      %p201 = pneg %p58
      %p202 = pneg %p55
      %p203 = pneg %p79
      %p204 = pneg %p76
      %p205 = pneg %p100
      %p206 = pneg %p97
      %p207 = pneg %p121
      %p208 = pneg %p118
      %p209 = pneg %p147
      %p210 = pneg %p144
      %s211 = smul.u32 2, %s16
      %p212 = scmp.lt.s32.totalorder %s211, 3
      %s213 = scalar_select %p212, %s211, 3
      %s214 = smul.addr %s213, 8
      %s215 = scalar_lea.vmem %s5, %s214
      %s216 = smul.u32 2, %s16
      %p217 = scmp.lt.s32.totalorder %s216, 3
      %s218 = scalar_select %p217, %s216, 3
      %s219 = smul.addr %s218, 8
      %s220 = scalar_lea.vmem %s0, %s219
      %s221 = smul.u32 2, %s16
      %s222 = smul.u32 2, %s16
      %p223 = scmp.lt.s32.totalorder %s222, 3
      %s224 = scalar_select %p223, %s222, 3
      %s225 = smul.addr %s224, 8
      %s226 = scalar_lea.vmem %s5, %s225
      %s227 = smul.u32 2, %s16
      %v229 = vld [vmem:[%s220] sm:$0xff]
      %v230 = vld [vmem:[%s220 + $0x8] sm:$0xff]
      %v231 = vpack.c.bf16 %v230, %v229
      %v232 = vld [vmem:[%s1] sm:$0xff]
      %v233 = vld [vmem:[%s1 + $0x8] sm:$0xff]
      %v234 = vld [vmem:[%s1 + $0x10] sm:$0xff]
      %v235 = vld [vmem:[%s1 + $0x18] sm:$0xff]
      %v236 = vld [vmem:[%s1 + $0x20] sm:$0xff]
      %v237 = vld [vmem:[%s1 + $0x28] sm:$0xff]
      %v238 = vld [vmem:[%s1 + $0x30] sm:$0xff]
      %v239 = vld [vmem:[%s1 + $0x38] sm:$0xff]
      %v240 = vld [vmem:[%s1 + $0x40] sm:$0xff]
      %v241 = vld [vmem:[%s1 + $0x48] sm:$0xff]
      %v242 = vld [vmem:[%s1 + $0x50] sm:$0xff]
      %v243 = vld [vmem:[%s1 + $0x58] sm:$0xff]
      %v244 = vld [vmem:[%s1 + $0x60] sm:$0xff]
      %v245 = vld [vmem:[%s1 + $0x68] sm:$0xff]
      %v246 = vld [vmem:[%s1 + $0x70] sm:$0xff]
      %v247 = vld [vmem:[%s1 + $0x78] sm:$0xff]
      %v248 = vld [vmem:[%s2] sm:$0x3]
      %v250 = vlaneseq
      %v251 = vshrl.u32 %v250, 7
      %v252 = vsub.s32 0, %v251
      %v253 = vrot.slane %v248, %v252
      %v254 = vlaneseq
      %v255 = vshrl.u32 %v254, 7
      %v256 = vsub.s32 1, %v255
      %v257 = vrot.slane %v248, %v256
      %v276 = vunpack.c.l.b16 %v232
      %v277 = vunpack.c.h.b16 %v232
      %v278 = vunpack.c.l.b16 %v233
      %v279 = vunpack.c.h.b16 %v233
      %v280 = vunpack.c.l.b16 %v234
      %v281 = vunpack.c.h.b16 %v234
      %v282 = vunpack.c.l.b16 %v235
      %v283 = vunpack.c.h.b16 %v235
      %v284 = vunpack.c.l.b16 %v236
      %v285 = vunpack.c.h.b16 %v236
      %v286 = vunpack.c.l.b16 %v237
      %v287 = vunpack.c.h.b16 %v237
      %v288 = vunpack.c.l.b16 %v238
      %v289 = vunpack.c.h.b16 %v238
      %v290 = vunpack.c.l.b16 %v239
      %v291 = vunpack.c.h.b16 %v239
      %v292 = vunpack.c.l.b16 %v240
      %v293 = vunpack.c.h.b16 %v240
      %v294 = vunpack.c.l.b16 %v241
      %v295 = vunpack.c.h.b16 %v241
      %v296 = vunpack.c.l.b16 %v242
      %v297 = vunpack.c.h.b16 %v242
      %v298 = vunpack.c.l.b16 %v243
      %v299 = vunpack.c.h.b16 %v243
      %v300 = vunpack.c.l.b16 %v244
      %v301 = vunpack.c.h.b16 %v244
      %v302 = vunpack.c.l.b16 %v245
      %v303 = vunpack.c.h.b16 %v245
      %v304 = vunpack.c.l.b16 %v246
      %v305 = vunpack.c.h.b16 %v246
      %v306 = vunpack.c.l.b16 %v247
      %v307 = vunpack.c.h.b16 %v247
      %v308 = vpack.c.b16 %v278, %v276
      %v309 = vpack.c.b16 %v279, %v277
      %v310 = vpack.c.b16 %v282, %v280
      %v311 = vpack.c.b16 %v283, %v281
      %v312 = vpack.c.b16 %v286, %v284
      %v313 = vpack.c.b16 %v287, %v285
      %v314 = vpack.c.b16 %v290, %v288
      %v315 = vpack.c.b16 %v291, %v289
      %v316 = vpack.c.b16 %v294, %v292
      %v317 = vpack.c.b16 %v295, %v293
      %v318 = vpack.c.b16 %v298, %v296
      %v319 = vpack.c.b16 %v299, %v297
      %v320 = vpack.c.b16 %v302, %v300
      %v321 = vpack.c.b16 %v303, %v301
      %v322 = vpack.c.b16 %v306, %v304
      %v323 = vpack.c.b16 %v307, %v305
      %340 = vmatprep.subr.bf16.mxu0 %v309
      %341 = vmatpush1.bf16.msra.mxu0 %v308
      %342 = vmatprep.subr.bf16.mxu0 %v311
      %343 = vmatpush1.bf16.msra.mxu0 %v310
      %344 = vmatprep.subr.bf16.mxu0 %v313
      %345 = vmatpush1.bf16.msra.mxu0 %v312
      %346 = vmatprep.subr.bf16.mxu0 %v315
      %347 = vmatpush1.bf16.msra.mxu0 %v314
      %348 = vmatprep.subr.bf16.mxu0 %v317
      %349 = vmatpush1.bf16.msra.mxu0 %v316
      %350 = vmatprep.subr.bf16.mxu0 %v319
      %351 = vmatpush1.bf16.msra.mxu0 %v318
      %352 = vmatprep.subr.bf16.mxu0 %v321
      %353 = vmatpush1.bf16.msra.mxu0 %v320
      %354 = vmatprep.subr.bf16.mxu0 %v323
      %355 = vmatpush1.bf16.msra.mxu0 %v322
      %356 = vmatprep.subr.bf16.mxu0 0
      %357 = vmatpush1.bf16.msra.mxu0 0
      %358 = vmatprep.subr.bf16.mxu0 0
      %359 = vmatpush1.bf16.msra.mxu0 0
      %360 = vmatprep.subr.bf16.mxu0 0
      %361 = vmatpush1.bf16.msra.mxu0 0
      %362 = vmatprep.subr.bf16.mxu0 0
      %363 = vmatpush1.bf16.msra.mxu0 0
      %364 = vmatprep.subr.bf16.mxu0 0
      %365 = vmatpush1.bf16.msra.mxu0 0
      %366 = vmatprep.subr.bf16.mxu0 0
      %367 = vmatpush1.bf16.msra.mxu0 0
      %368 = vmatprep.subr.bf16.mxu0 0
      %369 = vmatpush1.bf16.msra.mxu0 0
      %370 = vmatprep.subr.bf16.mxu0 0
      %371 = vmatpush1.bf16.msra.mxu0 0
      %372 = vmatprep.mubr.bf16.mxu0 0
      %373 = vmatmul.mubr.bf16.gmra.mrb[0].mxu0 %v231
      %v374 = vpop.f32.mrb[0].mxu0
      %v375 = vadd.f32 %v253, %v374
      %v376 = vpop.f32.mrb[0].mxu0
      %v377 = vadd.f32 %v257, %v376
      %v378 = vpop.f32.mrb[0].mxu0
      %v379 = vadd.f32 %v253, %v378
      %v380 = vpop.f32.mrb[0].mxu0
      %v381 = vadd.f32 %v257, %v380
      %382 = vdwg.mxu0
      %v383 = vmax.f32 %v375, 0.0
      %v384 = vmax.f32 %v377, 0.0
      %v385 = vmax.f32 %v379, 0.0
      %v386 = vmax.f32 %v381, 0.0
      %v387 = vpack.c.bf16 %v385, %v383
      %v388 = vpack.c.bf16 %v386, %v384
      %v389 = vld [vmem:[%s3] sm:$0xf]
      %v390 = vld [vmem:[%s3 + $0x4] sm:$0xf]
      %v391 = vld [vmem:[%s3 + $0x8] sm:$0xf]
      %v392 = vld [vmem:[%s3 + $0xc] sm:$0xf]
      %v393 = vld [vmem:[%s3 + $0x10] sm:$0xf]
      %v394 = vld [vmem:[%s3 + $0x14] sm:$0xf]
      %v395 = vld [vmem:[%s3 + $0x18] sm:$0xf]
      %v396 = vld [vmem:[%s3 + $0x1c] sm:$0xf]
      %v397 = vld [vmem:[%s3 + $0x20] sm:$0xf]
      %v398 = vld [vmem:[%s3 + $0x24] sm:$0xf]
      %v399 = vld [vmem:[%s3 + $0x28] sm:$0xf]
      %v400 = vld [vmem:[%s3 + $0x2c] sm:$0xf]
      %v401 = vld [vmem:[%s3 + $0x30] sm:$0xf]
      %v402 = vld [vmem:[%s3 + $0x34] sm:$0xf]
      %v403 = vld [vmem:[%s3 + $0x38] sm:$0xf]
      %v404 = vld [vmem:[%s3 + $0x3c] sm:$0xf]
      %v405 = vld [vmem:[%s3 + $0x40] sm:$0xf]
      %v406 = vld [vmem:[%s3 + $0x44] sm:$0xf]
      %v407 = vld [vmem:[%s3 + $0x48] sm:$0xf]
      %v408 = vld [vmem:[%s3 + $0x4c] sm:$0xf]
      %v409 = vld [vmem:[%s3 + $0x50] sm:$0xf]
      %v410 = vld [vmem:[%s3 + $0x54] sm:$0xf]
      %v411 = vld [vmem:[%s3 + $0x58] sm:$0xf]
      %v412 = vld [vmem:[%s3 + $0x5c] sm:$0xf]
      %v413 = vld [vmem:[%s3 + $0x60] sm:$0xf]
      %v414 = vld [vmem:[%s3 + $0x64] sm:$0xf]
      %v415 = vld [vmem:[%s3 + $0x68] sm:$0xf]
      %v416 = vld [vmem:[%s3 + $0x6c] sm:$0xf]
      %v417 = vld [vmem:[%s3 + $0x70] sm:$0xf]
      %v418 = vld [vmem:[%s3 + $0x74] sm:$0xf]
      %v419 = vld [vmem:[%s3 + $0x78] sm:$0xf]
      %v420 = vld [vmem:[%s3 + $0x7c] sm:$0xf]
      %v421 = vld [vmem:[%s4] sm:$0x1]
      %v423 = vlaneseq
      %v424 = vshrl.u32 %v423, 7
      %v425 = vsub.s32 0, %v424
      %v426 = vrot.slane %v421, %v425
      %v460 = vunpack.c.l.b16 %v389
      %v461 = vunpack.c.l.b16 %v390
      %v462 = vunpack.c.l.b16 %v391
      %v463 = vunpack.c.l.b16 %v392
      %v464 = vunpack.c.l.b16 %v393
      %v465 = vunpack.c.l.b16 %v394
      %v466 = vunpack.c.l.b16 %v395
      %v467 = vunpack.c.l.b16 %v396
      %v468 = vunpack.c.l.b16 %v397
      %v469 = vunpack.c.l.b16 %v398
      %v470 = vunpack.c.l.b16 %v399
      %v471 = vunpack.c.l.b16 %v400
      %v472 = vunpack.c.l.b16 %v401
      %v473 = vunpack.c.l.b16 %v402
      %v474 = vunpack.c.l.b16 %v403
      %v475 = vunpack.c.l.b16 %v404
      %v476 = vunpack.c.l.b16 %v405
      %v477 = vunpack.c.l.b16 %v406
      %v478 = vunpack.c.l.b16 %v407
      %v479 = vunpack.c.l.b16 %v408
      %v480 = vunpack.c.l.b16 %v409
      %v481 = vunpack.c.l.b16 %v410
      %v482 = vunpack.c.l.b16 %v411
      %v483 = vunpack.c.l.b16 %v412
      %v484 = vunpack.c.l.b16 %v413
      %v485 = vunpack.c.l.b16 %v414
      %v486 = vunpack.c.l.b16 %v415
      %v487 = vunpack.c.l.b16 %v416
      %v488 = vunpack.c.l.b16 %v417
      %v489 = vunpack.c.l.b16 %v418
      %v490 = vunpack.c.l.b16 %v419
      %v491 = vunpack.c.l.b16 %v420
      %v492 = vpack.c.b16 %v461, %v460
      %v493 = vpack.c.b16 %v463, %v462
      %v494 = vpack.c.b16 %v465, %v464
      %v495 = vpack.c.b16 %v467, %v466
      %v496 = vpack.c.b16 %v469, %v468
      %v497 = vpack.c.b16 %v471, %v470
      %v498 = vpack.c.b16 %v473, %v472
      %v499 = vpack.c.b16 %v475, %v474
      %v500 = vpack.c.b16 %v477, %v476
      %v501 = vpack.c.b16 %v479, %v478
      %v502 = vpack.c.b16 %v481, %v480
      %v503 = vpack.c.b16 %v483, %v482
      %v504 = vpack.c.b16 %v485, %v484
      %v505 = vpack.c.b16 %v487, %v486
      %v506 = vpack.c.b16 %v489, %v488
      %v507 = vpack.c.b16 %v491, %v490
      %524 = vmatprep.subr.bf16.mxu0 0
      %525 = vmatpush1.bf16.msra.mxu0 %v492
      %526 = vmatprep.subr.bf16.mxu0 0
      %527 = vmatpush1.bf16.msra.mxu0 %v493
      %528 = vmatprep.subr.bf16.mxu0 0
      %529 = vmatpush1.bf16.msra.mxu0 %v494
      %530 = vmatprep.subr.bf16.mxu0 0
      %531 = vmatpush1.bf16.msra.mxu0 %v495
      %532 = vmatprep.subr.bf16.mxu0 0
      %533 = vmatpush1.bf16.msra.mxu0 %v496
      %534 = vmatprep.subr.bf16.mxu0 0
      %535 = vmatpush1.bf16.msra.mxu0 %v497
      %536 = vmatprep.subr.bf16.mxu0 0
      %537 = vmatpush1.bf16.msra.mxu0 %v498
      %538 = vmatprep.subr.bf16.mxu0 0
      %539 = vmatpush1.bf16.msra.mxu0 %v499
      %540 = vmatprep.subr.bf16.mxu0 0
      %541 = vmatpush1.bf16.msra.mxu0 %v500
      %542 = vmatprep.subr.bf16.mxu0 0
      %543 = vmatpush1.bf16.msra.mxu0 %v501
      %544 = vmatprep.subr.bf16.mxu0 0
      %545 = vmatpush1.bf16.msra.mxu0 %v502
      %546 = vmatprep.subr.bf16.mxu0 0
      %547 = vmatpush1.bf16.msra.mxu0 %v503
      %548 = vmatprep.subr.bf16.mxu0 0
      %549 = vmatpush1.bf16.msra.mxu0 %v504
      %550 = vmatprep.subr.bf16.mxu0 0
      %551 = vmatpush1.bf16.msra.mxu0 %v505
      %552 = vmatprep.subr.bf16.mxu0 0
      %553 = vmatpush1.bf16.msra.mxu0 %v506
      %554 = vmatprep.subr.bf16.mxu0 0
      %555 = vmatpush1.bf16.msra.mxu0 %v507
      %556 = vmatprep.mubr.bf16.mxu0 %v388
      %557 = vmatmul.mubr.bf16.gmra.mrb[0].mxu0 %v387
      %v558 = vpop.f32.mrb[0].mxu0
      %v559 = vadd.f32 %v426, %v558
      %v560 = vpop.f32.mrb[0].mxu0
      %v561 = vpop.f32.mrb[0].mxu0
      %v562 = vadd.f32 %v426, %v561
      %v563 = vpop.f32.mrb[0].mxu0
      %564 = vdwg.mxu0
      %v565 = vxor.u32 %v559, 2147483648
      %v566 = vxor.u32 %v562, 2147483648
      %v567 = vmul.f32 %v565, 1.442695
      %v568 = vpow.pop %v567
      %v569 = vmul.f32 %v566, 1.442695
      %v570 = vpow.pop %v569
      %v571 = vadd.f32 %v568, 1.0
      %v572 = vadd.f32 %v570, 1.0
      %v573 = vrcp.pop %v571
      %v574 = vmul.f32 1.0, %v573
      %v575 = vrcp.pop %v572
      %v576 = vmul.f32 1.0, %v575
      %vm577 = vcmask 261120
      %578 = vst.msk [vmem:[%s226] sm:$0xff] %vm577, %v574
      %579 = vst.msk [vmem:[%s226 + $0x8] sm:$0xff] %vm577, %v576
      %s580 = smul.u32 2, %s16
      %p581 = scmp.lt.s32.totalorder %s580, 3
      %s582 = scalar_select %p581, %s580, 3
      %s583 = smul.addr %s582, 8
      %s584 = scalar_lea.vmem %s5, %s583
      // Predicated region
      $region41: #{binary_classifier_forward.1} parent=39 // pred_check
        %p585 = pneg %p144
      $region42: #{binary_classifier_forward.1} parent=39 // pred_check_branch
        %587 = sbr.rel (%p585) target = $region44
      $region43: #{binary_classifier_forward.1} parent=39 // pred_region
        %s588 = smul.u32 2, %s16
      $region44: #{binary_classifier_forward.1} parent=39 // pred_fallthru
        _
    $region40: #{binary_classifier_forward.1} parent=5 // pred_fallthru
      _
    %p589 = scmp.le.s32.totalorder 2, %s11
    // Predicated region
    $region45: #{binary_classifier_forward.1} parent=5 // pred_check
      %p590 = pneg %p589
    $region46: #{binary_classifier_forward.1} parent=5 // pred_check_branch
      %592 = sbr.rel (%p590) target = $region48
    $region47: #{binary_classifier_forward.1} parent=5 // pred_region
      %s593 = ssub.s32 %s11, 2
      // Predicated region
      $region49: #{binary_classifier_forward.1} parent=47 // pred_check
        %p594 = pneg %p150
      $region50: #{binary_classifier_forward.1} parent=47 // pred_check_branch
        %596 = sbr.rel (%p594) target = $region52
      $region51: #{binary_classifier_forward.1} parent=47 // pred_region
        %s597 = smul.u32 2, %s17
        %p598 = scmp.lt.s32.totalorder %s597, 3
        %s599 = scalar_select %p598, %s597, 3
        %s600 = smul.addr %s599, 8
        %s601 = scalar_lea.vmem %s5, %s600
      $region52: #{binary_classifier_forward.1} parent=47 // pred_fallthru
        _
    $region48: #{binary_classifier_forward.1} parent=5 // pred_fallthru
      _
  $region6: #{binary_classifier_forward.1} parent=0 // loop_footer
    %s15 = sadd.s32 1, %s11
  $region7: #{binary_classifier_forward.1} parent=0 // loop_footer_branch
    %10 = sbr.rel target = $region3
  $region8: #{binary_classifier_forward.1} parent=0 // loop_exit
    _

</llo_original>
